<compile_context>
chip_gen: v7x
topology: tpu7x:2x2x1
jax: 0.10.0
libtpu: 0.0.40
codegen_flags: <defaults>
</compile_context>

<pallas_src>
import math

import jax
import jax.numpy as jnp
from jax.experimental import pallas as pl
from jax.experimental.pallas import tpu as pltpu


# ----------------------------------------------------------------------------
# Kernels
# ----------------------------------------------------------------------------

def _outconv_kernel_vpu(x_ref, w_ref, b_ref, o_ref):
    # Tiny-channel path (Cin < 8): unrolled broadcast-FMA on the VPU.
    # x_ref: (nb, Cin, thw)  w_ref: (Cout, Cin)  b_ref: (Cout, 1)
    # o_ref: (nb, Cout, thw)
    w = w_ref[...].astype(jnp.float32)
    b = b_ref[...].astype(jnp.float32)
    nb, cin, thw = x_ref.shape
    cout = w.shape[0]
    for bi in range(nb):                         # nb <= 8 (bounded unroll)
        x = x_ref[bi].astype(jnp.float32)        # (Cin, thw)
        acc = jnp.broadcast_to(b, (cout, thw))   # bias folded into acc init
        for ci in range(cin):                    # cin < 8 (bounded unroll)
            # lane-broadcast of one weight column x sublane-broadcast of one
            # input-channel row -> pure VPU outer-product accumulate.
            acc = acc + w[:, ci:ci + 1] * x[ci:ci + 1, :]
        o_ref[bi] = acc.astype(o_ref.dtype)


def _outconv_kernel_mxu(x_ref, w_ref, b_ref, o_ref):
    # General path (Cin >= 8, no K tiling): (Cout, Cin) @ (Cin, thw) on the MXU.
    # x_ref: (nb, Cin, thw)  w_ref: (Cout, Cin)  b_ref: (Cout, 1)
    w = w_ref[...]
    b = b_ref[...].astype(jnp.float32)
    nb = x_ref.shape[0]
    for bi in range(nb):                         # nb <= 8 (bounded unroll)
        acc = jnp.dot(w, x_ref[bi], preferred_element_type=jnp.float32)
        o_ref[bi] = (acc + b).astype(o_ref.dtype)


def _outconv_kernel_mxu_ktiled(x_ref, w_ref, b_ref, o_ref, acc_ref):
    # Very-large-Cin path: K grid axis ("arbitrary") + resident f32 accumulator.
    # x_ref: (nb, tk, thw)  w_ref: (Cout, tk)  acc_ref: (nb, Cout, thw) f32
    k = pl.program_id(2)

    @pl.when(k == 0)
    def _():
        acc_ref[...] = jnp.broadcast_to(
            b_ref[...].astype(jnp.float32)[None], acc_ref.shape)

    nb = x_ref.shape[0]
    for bi in range(nb):
        acc_ref[bi] += jnp.dot(w_ref[...], x_ref[bi],
                               preferred_element_type=jnp.float32)

    @pl.when(k == pl.num_programs(2) - 1)
    def _():
        o_ref[...] = acc_ref[...].astype(o_ref.dtype)


# ----------------------------------------------------------------------------
# Wrapper
# ----------------------------------------------------------------------------

def _vmem_capacity_bytes():
    try:
        return int(pltpu.get_tpu_info().vmem_capacity_bytes)
    except Exception:
        return 64 * 1024 * 1024  # conservative (v7x physical VMEM per TC)


def _round_up(a, m):
    return ((a + m - 1) // m) * m


def outconv_pallas(x_nchw, weight, bias, *, max_tile_hw=32768, max_nb=8):
    """1x1 conv, NCHW in / NCHW out.

    x_nchw: (N, Cin, H, W); weight: (Cout, Cin, 1, 1); bias: (Cout,).
    """
    N, Cin, H, W = x_nchw.shape
    Cout = weight.shape[0]
    HW = H * W
    dtype = x_nchw.dtype
    in_b = dtype.itemsize
    pack = max(1, 4 // in_b) * 8          # sublane rows per 32-bit: f32->8, bf16->16

    # ---- lane-dense spatial extent: pad only if HW is not a multiple of 128 ----
    hw_pad = _round_up(HW, 128)

    # ---- generation-aware VMEM budget (v5e/v6e: 128 MiB, v7x: 64 MiB) ----
    phys = _vmem_capacity_bytes()
    vmem_limit = max(32 * 1024 * 1024, min((phys * 3) // 4, 128 * 1024 * 1024))
    tile_budget = (vmem_limit * 3) // 5   # leave headroom for compiler scratch

    # ---- routing: MXU whenever Cin >= 8; VPU broadcast-FMA only for tiny Cin ----
    use_mxu = Cin >= 8

    # ---- K tiling (only for very large Cin so the weight buffers stay modest) ----
    tk, n_k = Cin, 1
    if use_mxu:
        w_block_bytes = 2 * _round_up(Cout, 8) * _round_up(Cin, 128) * 4
        if w_block_bytes > tile_budget // 4 and Cin % 128 == 0:
            for cand in (512, 256, 128):
                if Cin % cand == 0:
                    tk = cand
                    break
            n_k = Cin // tk

    def footprint(nb, thw):
        f = 2 * nb * _round_up(tk, pack) * thw * in_b       # x (double-buffered)
        f += 2 * nb * _round_up(Cout, pack) * thw * in_b    # out (double-buffered)
        f += 2 * _round_up(Cout, 8) * _round_up(tk, 128) * 4   # weight
        f += 2 * _round_up(Cout, 8) * 128 * 4                  # bias tile
        if n_k > 1:
            f += nb * _round_up(Cout, 8) * thw * 4             # f32 accumulator
        return f

    # ---- spatial tile: largest multiple-of-128 divisor of hw_pad that fits ----
    m = hw_pad // 128
    thw = 128
    for d in range(1, m + 1):
        if m % d == 0:
            cand = 128 * d
            if cand <= max_tile_hw and footprint(1, cand) <= tile_budget:
                thw = cand
    n_j = hw_pad // thw

    # ---- batch blocking: amortize per-step overhead when tiles are small ----
    nb = 1
    for cand in range(2, min(N, max_nb) + 1):
        if N % cand == 0 and footprint(cand, thw) <= tile_budget:
            nb = cand
    n_batch = N // nb

    # ---- inputs: free reshape; pad only the ragged lane tail (if any) ----
    x_flat = x_nchw.reshape(N, Cin, HW)
    if hw_pad != HW:
        # TODO(synk): handle the ragged last spatial tile in-kernel instead of
        # paying this HBM round-trip (only hit when H*W % 128 != 0).
        x_flat = jnp.pad(x_flat, ((0, 0), (0, 0), (0, hw_pad - HW)))

    w_mat = weight.reshape(Cout, Cin)      # (Cout, Cin) — no transpose needed
    b_col = bias.reshape(Cout, 1)

    if n_k == 1:
        kernel = _outconv_kernel_mxu if use_mxu else _outconv_kernel_vpu
        grid = (n_batch, n_j)
        in_specs = [
            pl.BlockSpec((nb, Cin, thw), lambda n, j: (n, 0, j)),
            pl.BlockSpec((Cout, Cin), lambda n, j: (0, 0)),
            pl.BlockSpec((Cout, 1), lambda n, j: (0, 0)),
        ]
        out_spec = pl.BlockSpec((nb, Cout, thw), lambda n, j: (n, 0, j))
        scratch = []
        dims = ("parallel", "parallel")
    else:
        kernel = _outconv_kernel_mxu_ktiled
        grid = (n_batch, n_j, n_k)
        in_specs = [
            pl.BlockSpec((nb, tk, thw), lambda n, j, k: (n, k, j)),
            pl.BlockSpec((Cout, tk), lambda n, j, k: (0, k)),
            pl.BlockSpec((Cout, 1), lambda n, j, k: (0, 0)),
        ]
        out_spec = pl.BlockSpec((nb, Cout, thw), lambda n, j, k: (n, 0, j))
        scratch = [pltpu.VMEM((nb, Cout, thw), jnp.float32)]
        dims = ("parallel", "parallel", "arbitrary")

    out = pl.pallas_call(
        kernel,
        out_shape=jax.ShapeDtypeStruct((N, Cout, hw_pad), dtype),
        grid_spec=pltpu.PrefetchScalarGridSpec(
            num_scalar_prefetch=0,
            grid=grid,
            in_specs=in_specs,
            out_specs=out_spec,
            scratch_shapes=scratch,
        ),
        compiler_params=pltpu.CompilerParams(
            dimension_semantics=dims,
            vmem_limit_bytes=int(vmem_limit),
        ),
    )(x_flat, w_mat, b_col)

    if hw_pad != HW:
        out = out[:, :, :HW]
    return out.reshape(N, Cout, H, W)      # free reshape, no transpose


def init_outconv_params(key, in_channels, out_channels, dtype=jnp.float32):
    """Deterministic init mirroring nn.Conv2d default (kaiming-uniform style)."""
    kw, kb = jax.random.split(key)
    fan_in = in_channels
    w_bound = math.sqrt(1.0 / fan_in) * math.sqrt(3.0)   # kaiming_uniform a=sqrt(5)
    b_bound = 1.0 / math.sqrt(fan_in)
    weight = jax.random.uniform(kw, (out_channels, in_channels, 1, 1),
                                dtype, -w_bound, w_bound)
    bias = jax.random.uniform(kb, (out_channels,), dtype, -b_bound, b_bound)
    return weight, bias


if __name__ == "__main__":
    key = jax.random.PRNGKey(0)
    k_x, k_p, k_x2, k_p2 = jax.random.split(key, 4)

    # Case 1: tiny channels (OutConv-style) -> VPU broadcast-FMA path.
    N, Cin, H, W, Cout = 2, 4, 16, 16, 8
    x = jax.random.normal(k_x, (N, Cin, H, W), jnp.float32)
    weight, bias = init_outconv_params(k_p, Cin, Cout)
    y = jax.block_until_ready(outconv_pallas(x, weight, bias))
    y_ref = jnp.einsum("nchw,oc->nohw", x, weight.reshape(Cout, Cin)) \
        + bias.reshape(1, Cout, 1, 1)
    assert y.shape == (N, Cout, H, W)
    assert jnp.allclose(y, y_ref, atol=1e-5, rtol=1e-5)

    # Case 2: moderate channels -> MXU path (Cin >= 8 gate).
    N2, Cin2, H2, W2, Cout2 = 2, 32, 16, 16, 16
    x2 = jax.random.normal(k_x2, (N2, Cin2, H2, W2), jnp.float32)
    w2, b2 = init_outconv_params(k_p2, Cin2, Cout2)
    y2 = jax.block_until_ready(outconv_pallas(x2, w2, b2))
    y2_ref = jnp.einsum("nchw,oc->nohw", x2, w2.reshape(Cout2, Cin2)) \
        + b2.reshape(1, Cout2, 1, 1)
    assert y2.shape == (N2, Cout2, H2, W2)
    # Loose tolerance: MXU f32 matmul at default precision may use bf16 passes.
    assert jnp.allclose(y2, y2_ref, atol=2e-2, rtol=2e-2)

    print("KERNEL_OK")
</pallas_src>

<mosaic_0001>
module attributes {stable_mosaic.version = 11 : i64} {
  func.func @_outconv_kernel_vpu(%arg0: i32, %arg1: i32, %arg2: memref<2x4x256xf32, #tpu.memory_space<vmem>>, %arg3: memref<8x4xf32, #tpu.memory_space<vmem>>, %arg4: memref<8x1xf32, #tpu.memory_space<vmem>>, %arg5: memref<2x8x256xf32, #tpu.memory_space<vmem>>) attributes {dimension_semantics = [#tpu.dimension_semantics<parallel>, #tpu.dimension_semantics<parallel>], iteration_bounds = array<i64: 1, 1>, scalar_prefetch = 0 : i64, scratch_operands = 0 : i64, tpu.core_type = #tpu.core_type<tc>, window_params = [{transform_indices = @transform_0, window_bounds = array<i64: 2, 4, 256>}, {pipeline_mode = #tpu.pipeline_mode<synchronous>, transform_indices = @transform_1, window_bounds = array<i64: 8, 4>}, {pipeline_mode = #tpu.pipeline_mode<synchronous>, transform_indices = @transform_2, window_bounds = array<i64: 8, 1>}, {transform_indices = @transform_3, window_bounds = array<i64: 2, 8, 256>}]} {
    %c0 = arith.constant 0 : index
    %c0_0 = arith.constant 0 : index
    %0 = vector.load %arg3[%c0, %c0_0] : memref<8x4xf32, #tpu.memory_space<vmem>>, vector<8x4xf32>
    %c0_1 = arith.constant 0 : index
    %c0_2 = arith.constant 0 : index
    %1 = vector.load %arg4[%c0_1, %c0_2] : memref<8x1xf32, #tpu.memory_space<vmem>>, vector<8x1xf32>
    %c0_3 = arith.constant 0 : index
    %c0_4 = arith.constant 0 : index
    %c0_5 = arith.constant 0 : index
    %2 = vector.load %arg2[%c0_3, %c0_4, %c0_5] : memref<2x4x256xf32, #tpu.memory_space<vmem>>, vector<1x4x256xf32>
    %3 = vector.shape_cast %2 : vector<1x4x256xf32> to vector<4x256xf32>
    %4 = vector.shape_cast %1 : vector<8x1xf32> to vector<8x1xf32>
    %5 = vector.broadcast %4 : vector<8x1xf32> to vector<8x256xf32>
    %6 = vector.extract_strided_slice %0 {offsets = [0, 0], sizes = [8, 1], strides = [1, 1]} : vector<8x4xf32> to vector<8x1xf32>
    %7 = vector.extract_strided_slice %3 {offsets = [0, 0], sizes = [1, 256], strides = [1, 1]} : vector<4x256xf32> to vector<1x256xf32>
    %8 = vector.broadcast %6 : vector<8x1xf32> to vector<8x256xf32>
    %9 = vector.broadcast %7 : vector<1x256xf32> to vector<8x256xf32>
    %10 = arith.mulf %8, %9 : vector<8x256xf32>
    %11 = arith.addf %5, %10 : vector<8x256xf32>
    %12 = vector.extract_strided_slice %0 {offsets = [0, 1], sizes = [8, 1], strides = [1, 1]} : vector<8x4xf32> to vector<8x1xf32>
    %13 = vector.extract_strided_slice %3 {offsets = [1, 0], sizes = [1, 256], strides = [1, 1]} : vector<4x256xf32> to vector<1x256xf32>
    %14 = vector.broadcast %12 : vector<8x1xf32> to vector<8x256xf32>
    %15 = vector.broadcast %13 : vector<1x256xf32> to vector<8x256xf32>
    %16 = arith.mulf %14, %15 : vector<8x256xf32>
    %17 = arith.addf %11, %16 : vector<8x256xf32>
    %18 = vector.extract_strided_slice %0 {offsets = [0, 2], sizes = [8, 1], strides = [1, 1]} : vector<8x4xf32> to vector<8x1xf32>
    %19 = vector.extract_strided_slice %3 {offsets = [2, 0], sizes = [1, 256], strides = [1, 1]} : vector<4x256xf32> to vector<1x256xf32>
    %20 = vector.broadcast %18 : vector<8x1xf32> to vector<8x256xf32>
    %21 = vector.broadcast %19 : vector<1x256xf32> to vector<8x256xf32>
    %22 = arith.mulf %20, %21 : vector<8x256xf32>
    %23 = arith.addf %17, %22 : vector<8x256xf32>
    %24 = vector.extract_strided_slice %0 {offsets = [0, 3], sizes = [8, 1], strides = [1, 1]} : vector<8x4xf32> to vector<8x1xf32>
    %25 = vector.extract_strided_slice %3 {offsets = [3, 0], sizes = [1, 256], strides = [1, 1]} : vector<4x256xf32> to vector<1x256xf32>
    %26 = vector.broadcast %24 : vector<8x1xf32> to vector<8x256xf32>
    %27 = vector.broadcast %25 : vector<1x256xf32> to vector<8x256xf32>
    %28 = arith.mulf %26, %27 : vector<8x256xf32>
    %29 = arith.addf %23, %28 : vector<8x256xf32>
    %c0_6 = arith.constant 0 : index
    %c0_7 = arith.constant 0 : index
    %c0_8 = arith.constant 0 : index
    %30 = vector.load %arg5[%c0_6, %c0_7, %c0_8] : memref<2x8x256xf32, #tpu.memory_space<vmem>>, vector<1x8x256xf32>
    %31 = vector.shape_cast %30 : vector<1x8x256xf32> to vector<8x256xf32>
    %32 = vector.shape_cast %29 : vector<8x256xf32> to vector<1x8x256xf32>
    tpu.vector_store %arg5[%c0_6, %c0_7, %c0_8], %32 {strides = array<i32>} : memref<2x8x256xf32, #tpu.memory_space<vmem>>, vector<1x8x256xf32>,
    %c1 = arith.constant 1 : index
    %c0_9 = arith.constant 0 : index
    %c0_10 = arith.constant 0 : index
    %33 = vector.load %arg2[%c1, %c0_9, %c0_10] : memref<2x4x256xf32, #tpu.memory_space<vmem>>, vector<1x4x256xf32>
    %34 = vector.shape_cast %33 : vector<1x4x256xf32> to vector<4x256xf32>
    %35 = vector.shape_cast %1 : vector<8x1xf32> to vector<8x1xf32>
    %36 = vector.broadcast %35 : vector<8x1xf32> to vector<8x256xf32>
    %37 = vector.extract_strided_slice %0 {offsets = [0, 0], sizes = [8, 1], strides = [1, 1]} : vector<8x4xf32> to vector<8x1xf32>
    %38 = vector.extract_strided_slice %34 {offsets = [0, 0], sizes = [1, 256], strides = [1, 1]} : vector<4x256xf32> to vector<1x256xf32>
    %39 = vector.broadcast %37 : vector<8x1xf32> to vector<8x256xf32>
    %40 = vector.broadcast %38 : vector<1x256xf32> to vector<8x256xf32>
    %41 = arith.mulf %39, %40 : vector<8x256xf32>
    %42 = arith.addf %36, %41 : vector<8x256xf32>
    %43 = vector.extract_strided_slice %0 {offsets = [0, 1], sizes = [8, 1], strides = [1, 1]} : vector<8x4xf32> to vector<8x1xf32>
    %44 = vector.extract_strided_slice %34 {offsets = [1, 0], sizes = [1, 256], strides = [1, 1]} : vector<4x256xf32> to vector<1x256xf32>
    %45 = vector.broadcast %43 : vector<8x1xf32> to vector<8x256xf32>
    %46 = vector.broadcast %44 : vector<1x256xf32> to vector<8x256xf32>
    %47 = arith.mulf %45, %46 : vector<8x256xf32>
    %48 = arith.addf %42, %47 : vector<8x256xf32>
    %49 = vector.extract_strided_slice %0 {offsets = [0, 2], sizes = [8, 1], strides = [1, 1]} : vector<8x4xf32> to vector<8x1xf32>
    %50 = vector.extract_strided_slice %34 {offsets = [2, 0], sizes = [1, 256], strides = [1, 1]} : vector<4x256xf32> to vector<1x256xf32>
    %51 = vector.broadcast %49 : vector<8x1xf32> to vector<8x256xf32>
    %52 = vector.broadcast %50 : vector<1x256xf32> to vector<8x256xf32>
    %53 = arith.mulf %51, %52 : vector<8x256xf32>
    %54 = arith.addf %48, %53 : vector<8x256xf32>
    %55 = vector.extract_strided_slice %0 {offsets = [0, 3], sizes = [8, 1], strides = [1, 1]} : vector<8x4xf32> to vector<8x1xf32>
    %56 = vector.extract_strided_slice %34 {offsets = [3, 0], sizes = [1, 256], strides = [1, 1]} : vector<4x256xf32> to vector<1x256xf32>
    %57 = vector.broadcast %55 : vector<8x1xf32> to vector<8x256xf32>
    %58 = vector.broadcast %56 : vector<1x256xf32> to vector<8x256xf32>
    %59 = arith.mulf %57, %58 : vector<8x256xf32>
    %60 = arith.addf %54, %59 : vector<8x256xf32>
    %c1_11 = arith.constant 1 : index
    %c0_12 = arith.constant 0 : index
    %c0_13 = arith.constant 0 : index
    %61 = vector.load %arg5[%c1_11, %c0_12, %c0_13] : memref<2x8x256xf32, #tpu.memory_space<vmem>>, vector<1x8x256xf32>
    %62 = vector.shape_cast %61 : vector<1x8x256xf32> to vector<8x256xf32>
    %63 = vector.shape_cast %60 : vector<8x256xf32> to vector<1x8x256xf32>
    tpu.vector_store %arg5[%c1_11, %c0_12, %c0_13], %63 {strides = array<i32>} : memref<2x8x256xf32, #tpu.memory_space<vmem>>, vector<1x8x256xf32>,
    return
  }
  func.func @transform_0(%arg0: i32, %arg1: i32) -> (i32, i32, i32) {
    %c0_i32 = arith.constant 0 : i32
    %c0_i32_0 = arith.constant 0 : i32
    return %arg0, %c0_i32, %arg1 : i32, i32, i32
  }
  func.func @transform_1(%arg0: i32, %arg1: i32) -> (i32, i32) {
    %c0_i32 = arith.constant 0 : i32
    %c0_i32_0 = arith.constant 0 : i32
    %c0_i32_1 = arith.constant 0 : i32
    return %c0_i32, %c0_i32_0 : i32, i32
  }
  func.func @transform_2(%arg0: i32, %arg1: i32) -> (i32, i32) {
    %c0_i32 = arith.constant 0 : i32
    %c0_i32_0 = arith.constant 0 : i32
    %c0_i32_1 = arith.constant 0 : i32
    return %c0_i32, %c0_i32_0 : i32, i32
  }
  func.func @transform_3(%arg0: i32, %arg1: i32) -> (i32, i32, i32) {
    %c0_i32 = arith.constant 0 : i32
    %c0_i32_0 = arith.constant 0 : i32
    return %arg0, %c0_i32, %arg1 : i32, i32, i32
  }
}

</mosaic_0001>

<llo_original>
// kernel: tpu_custom_call.1
$region0: #{tpu_custom_call.1}
  #allocation0 [shape = 'u32[]', space=smem, size = 0x4, offset = 0x4, fixed_abs, tag = 'smem constant byte address 0x4 - core index']
  #allocation1 [shape = 'u32[144,128]{1,0:T(1,128)}', space=vmem, size = 0x12000, scoped, tag = 'internal scratch']
  %s0 = inlined_call_operand.vmem [shape: f32[2,4,256], index: 0, kind: input, shape index: {}]
  %s1 = inlined_call_operand.vmem [shape: f32[8,4], index: 1, kind: input, shape index: {}]
  %s2 = inlined_call_operand.vmem [shape: f32[8,1], index: 2, kind: input, shape index: {}]
  %s3 = inlined_call_operand.hbm [shape: f32[2,8,256], index: 3, kind: output, shape index: {}]
  %s4 = sld [smem:[#allocation0]]
  $region22: #{tpu_custom_call.1} parent=0
    _
  %s6 = ssub.s32 1, %s4
  %s7 = scalar_select 0, %s6, %s4
  $region1: #{tpu_custom_call.1} parent=0
    #allocation2 [shape = 'u8[16384]{0}', space=vmem, size = 0x4000, scoped, tag = 'output window, operand 0, single buffered']
    #allocation3 [shape = 's32[1]{0}', space=sflag, size = 0x4, scoped, tag = 'scoped memory for tpu_custom_call.1']
    %8 = vsyncpa [#allocation3], 0
    // Predicated region
    $region2: #{tpu_custom_call.1} parent=1 // pred_check
      _
    $region3: #{tpu_custom_call.1} parent=1 // pred_check_branch
      %10 = sbr.rel (0) target = $region5
    $region4: #{tpu_custom_call.1} parent=1 // pred_region
      _
    $region5: #{tpu_custom_call.1} parent=1 // pred_fallthru
      _
    // Predicated region
    $region6: #{tpu_custom_call.1} parent=1 // pred_check
      _
    $region7: #{tpu_custom_call.1} parent=1 // pred_check_branch
      %12 = sbr.rel (0) target = $region9
    $region8: #{tpu_custom_call.1} parent=1 // pred_region
      _
    $region9: #{tpu_custom_call.1} parent=1 // pred_fallthru
      _
    // Predicated region
    $region10: #{tpu_custom_call.1} parent=1 // pred_check
      _
    $region11: #{tpu_custom_call.1} parent=1 // pred_check_branch
      %14 = sbr.rel (0) target = $region13
    $region12: #{tpu_custom_call.1} parent=1 // pred_region
      _
    $region13: #{tpu_custom_call.1} parent=1 // pred_fallthru
      _
    %v15 = vld [vmem:[%s1] sm:$0xff]
    %v16 = vld [vmem:[%s2] sm:$0xff]
    %v17 = vld [vmem:[%s0] sm:$0xff]
    %19 = vset.pattern.permute.xlu0 0
    %20 = vperm.xlu0 %19, %v16
    %v21 = vpop.permute.xlu0 %20
    %24 = vset.pattern.permute.xlu0 0
    %25 = vperm.xlu0 %24, %v15
    %v26 = vpop.permute.xlu0 %25
    %v29 = vlaneseq
    %v30 = vshrl.u32 %v29, 7
    %v31 = vsub.s32 0, %v30
    %v32 = vrot.slane %v17, %v31
    %v33 = vlaneseq
    %v34 = vshrl.u32 %v33, 7
    %v35 = vsub.s32 4, %v34
    %v36 = vrot.slane %v17, %v35
    %v39 = vlaneseq
    %v40 = vshrl.u32 %v39, 7
    %v41 = vsub.s32 0, %v40
    %v42 = vrot.slane %v32, %v41
    %v43 = vlaneseq
    %v44 = vshrl.u32 %v43, 7
    %v45 = vsub.s32 0, %v44
    %v46 = vrot.slane %v36, %v45
    %v47 = vmul.f32 %v26, %v42
    %v48 = vmul.f32 %v26, %v46
    %v49 = vadd.f32 %v21, %v47
    %v50 = vadd.f32 %v21, %v48
    %51 = vset.pattern.permute.xlu0 1
    %52 = vperm.xlu0 %51, %v15
    %v53 = vpop.permute.xlu0 %52
    %v55 = vlaneseq
    %v56 = vshrl.u32 %v55, 7
    %v57 = vsub.s32 1, %v56
    %v58 = vrot.slane %v17, %v57
    %v59 = vlaneseq
    %v60 = vshrl.u32 %v59, 7
    %v61 = vsub.s32 5, %v60
    %v62 = vrot.slane %v17, %v61
    %v65 = vlaneseq
    %v66 = vshrl.u32 %v65, 7
    %v67 = vsub.s32 1, %v66
    %v68 = vrot.slane %v58, %v67
    %v69 = vlaneseq
    %v70 = vshrl.u32 %v69, 7
    %v71 = vsub.s32 1, %v70
    %v72 = vrot.slane %v62, %v71
    %v73 = vmul.f32 %v53, %v68
    %v74 = vmul.f32 %v53, %v72
    %v75 = vadd.f32 %v49, %v73
    %v76 = vadd.f32 %v50, %v74
    %77 = vset.pattern.permute.xlu0 2
    %78 = vperm.xlu0 %77, %v15
    %v79 = vpop.permute.xlu0 %78
    %v81 = vlaneseq
    %v82 = vshrl.u32 %v81, 7
    %v83 = vsub.s32 2, %v82
    %v84 = vrot.slane %v17, %v83
    %v85 = vlaneseq
    %v86 = vshrl.u32 %v85, 7
    %v87 = vsub.s32 6, %v86
    %v88 = vrot.slane %v17, %v87
    %v91 = vlaneseq
    %v92 = vshrl.u32 %v91, 7
    %v93 = vsub.s32 2, %v92
    %v94 = vrot.slane %v84, %v93
    %v95 = vlaneseq
    %v96 = vshrl.u32 %v95, 7
    %v97 = vsub.s32 2, %v96
    %v98 = vrot.slane %v88, %v97
    %v99 = vmul.f32 %v79, %v94
    %v100 = vmul.f32 %v79, %v98
    %v101 = vadd.f32 %v75, %v99
    %v102 = vadd.f32 %v76, %v100
    %103 = vset.pattern.permute.xlu0 3
    %104 = vperm.xlu0 %103, %v15
    %v105 = vpop.permute.xlu0 %104
    %v107 = vlaneseq
    %v108 = vshrl.u32 %v107, 7
    %v109 = vsub.s32 3, %v108
    %v110 = vrot.slane %v17, %v109
    %v111 = vlaneseq
    %v112 = vshrl.u32 %v111, 7
    %v113 = vsub.s32 7, %v112
    %v114 = vrot.slane %v17, %v113
    %v117 = vlaneseq
    %v118 = vshrl.u32 %v117, 7
    %v119 = vsub.s32 3, %v118
    %v120 = vrot.slane %v110, %v119
    %v121 = vlaneseq
    %v122 = vshrl.u32 %v121, 7
    %v123 = vsub.s32 3, %v122
    %v124 = vrot.slane %v114, %v123
    %v125 = vmul.f32 %v105, %v120
    %v126 = vmul.f32 %v105, %v124
    %v127 = vadd.f32 %v101, %v125
    %v128 = vadd.f32 %v102, %v126
    %129 = vst [vmem:[#allocation2] sm:$0xff] %v127
    %130 = vst [vmem:[#allocation2 + $0x8] sm:$0xff] %v128
    %s131 = scalar_lea.vmem %s0, 8
    %v132 = vld [vmem:[%s131] sm:$0xff]
    %v134 = vlaneseq
    %v135 = vshrl.u32 %v134, 7
    %v136 = vsub.s32 0, %v135
    %v137 = vrot.slane %v132, %v136
    %v138 = vlaneseq
    %v139 = vshrl.u32 %v138, 7
    %v140 = vsub.s32 4, %v139
    %v141 = vrot.slane %v132, %v140
    %v144 = vlaneseq
    %v145 = vshrl.u32 %v144, 7
    %v146 = vsub.s32 0, %v145
    %v147 = vrot.slane %v137, %v146
    %v148 = vlaneseq
    %v149 = vshrl.u32 %v148, 7
    %v150 = vsub.s32 0, %v149
    %v151 = vrot.slane %v141, %v150
    %v152 = vmul.f32 %v26, %v147
    %v153 = vmul.f32 %v26, %v151
    %v154 = vadd.f32 %v21, %v152
    %v155 = vadd.f32 %v21, %v153
    %v156 = vlaneseq
    %v157 = vshrl.u32 %v156, 7
    %v158 = vsub.s32 1, %v157
    %v159 = vrot.slane %v132, %v158
    %v160 = vlaneseq
    %v161 = vshrl.u32 %v160, 7
    %v162 = vsub.s32 5, %v161
    %v163 = vrot.slane %v132, %v162
    %v166 = vlaneseq
    %v167 = vshrl.u32 %v166, 7
    %v168 = vsub.s32 1, %v167
    %v169 = vrot.slane %v159, %v168
    %v170 = vlaneseq
    %v171 = vshrl.u32 %v170, 7
    %v172 = vsub.s32 1, %v171
    %v173 = vrot.slane %v163, %v172
    %v174 = vmul.f32 %v53, %v169
    %v175 = vmul.f32 %v53, %v173
    %v176 = vadd.f32 %v154, %v174
    %v177 = vadd.f32 %v155, %v175
    %v178 = vlaneseq
    %v179 = vshrl.u32 %v178, 7
    %v180 = vsub.s32 2, %v179
    %v181 = vrot.slane %v132, %v180
    %v182 = vlaneseq
    %v183 = vshrl.u32 %v182, 7
    %v184 = vsub.s32 6, %v183
    %v185 = vrot.slane %v132, %v184
    %v188 = vlaneseq
    %v189 = vshrl.u32 %v188, 7
    %v190 = vsub.s32 2, %v189
    %v191 = vrot.slane %v181, %v190
    %v192 = vlaneseq
    %v193 = vshrl.u32 %v192, 7
    %v194 = vsub.s32 2, %v193
    %v195 = vrot.slane %v185, %v194
    %v196 = vmul.f32 %v79, %v191
    %v197 = vmul.f32 %v79, %v195
    %v198 = vadd.f32 %v176, %v196
    %v199 = vadd.f32 %v177, %v197
    %v200 = vlaneseq
    %v201 = vshrl.u32 %v200, 7
    %v202 = vsub.s32 3, %v201
    %v203 = vrot.slane %v132, %v202
    %v204 = vlaneseq
    %v205 = vshrl.u32 %v204, 7
    %v206 = vsub.s32 7, %v205
    %v207 = vrot.slane %v132, %v206
    %v210 = vlaneseq
    %v211 = vshrl.u32 %v210, 7
    %v212 = vsub.s32 3, %v211
    %v213 = vrot.slane %v203, %v212
    %v214 = vlaneseq
    %v215 = vshrl.u32 %v214, 7
    %v216 = vsub.s32 3, %v215
    %v217 = vrot.slane %v207, %v216
    %v218 = vmul.f32 %v105, %v213
    %v219 = vmul.f32 %v105, %v217
    %v220 = vadd.f32 %v198, %v218
    %v221 = vadd.f32 %v199, %v219
    %s222 = scalar_lea.vmem [#allocation2], 16
    %223 = vst [vmem:[%s222] sm:$0xff] %v220
    %224 = vst [vmem:[%s222 + $0x8] sm:$0xff] %v221
    // Predicated region
    $region14: #{tpu_custom_call.1} parent=1 // pred_check
      _
    $region15: #{tpu_custom_call.1} parent=1 // pred_check_branch
      %226 = sbr.rel (0) target = $region17
    $region16: #{tpu_custom_call.1} parent=1 // pred_region
      %s228 = ssub.s32 512, 512
      %229 = vsyncadd [#allocation3], %s228
      %s230 = sshll.u32 [#allocation2], 4
      %s231 = int_to_ptr.vmem [resolvable:$true] %s230
      %236 = dma.vmem_to_hbm [thread:$0]  %s231, 512, %s3, [#allocation3], 256, 256, 16
    $region17: #{tpu_custom_call.1} parent=1 // pred_fallthru
      _
    // Predicated region
    $region18: #{tpu_custom_call.1} parent=1 // pred_check
      _
    $region19: #{tpu_custom_call.1} parent=1 // pred_check_branch
      %238 = sbr.rel (0) target = $region21
    $region20: #{tpu_custom_call.1} parent=1 // pred_region
      %239 = dma.done [#allocation3], 512
    $region21: #{tpu_custom_call.1} parent=1 // pred_fallthru
      _
    %240 = vsyncpa [#allocation3], 1

</llo_original>
